<compile_context>
chip_gen: v5e
topology: v5e:2x2
jax: 0.10.0
libtpu: 0.0.40
codegen_flags: <defaults>
</compile_context>

<pallas_src>
import functools

import jax
import jax.numpy as jnp
from jax import lax
from jax.experimental import pallas as pl
from jax.experimental.pallas import tpu as pltpu

LANE = 128


def _block_kernel(x_ref, w1_ref, b1_ref, a1_ref, a2_ref, dw_ref, db_ref,
                  wcat_ref, bcat_ref, out_ref, skip_ref, *,
                  dil, pad_left, P, L_valid, Bc):
    Lp = x_ref.shape[-1]
    H = dw_ref.shape[0]

    # ---- hoisted constants (once per grid step, shared by both norms) ----
    idx = lax.broadcasted_iota(jnp.int32, (1, Lp), 1)            # lane index row
    inv_cnt = 1.0 / ((idx + 1).astype(jnp.float32) * float(H))   # 1 / (H*(k+1))
    valid = idx < L_valid                                        # lanes < L

    scan_steps = []                                              # (shift, mask)
    sh = 1
    while sh < Lp:
        scan_steps.append((sh, idx >= sh))
        sh *= 2

    # hoisted weights / biases / tap columns
    w1 = w1_ref[...]                 # (H, Bc)
    wcat = wcat_ref[...]             # (Bc+Sc, H)
    b1 = b1_ref[...]                 # (H, 1)
    bcat = bcat_ref[...]             # (Bc+Sc, 1)
    db = db_ref[...]                 # (H, 1)
    a1 = a1_ref[...]                 # (1, 1) PReLU slope
    a2 = a2_ref[...]                 # (1, 1)
    dw_cols = [dw_ref[:, p:p + 1] for p in range(P)]             # P x (H, 1)

    def cum_norm(v):
        # Cumulative (over time, joint over channels) layer norm, eps = 0.
        # Fused Hillis-Steele scan over the stacked (s1, s2) pair.
        s = jnp.concatenate(
            [jnp.sum(v, axis=0, keepdims=True),
             jnp.sum(v * v, axis=0, keepdims=True)], axis=0)      # (2, Lp)
        for shift, mask in scan_steps:
            rolled = pltpu.roll(s, shift=shift, axis=1)
            s = s + jnp.where(mask, rolled, 0.0)
        mean = s[0:1, :] * inv_cnt
        var = s[1:2, :] * inv_cnt - mean * mean
        return (v - mean) * lax.rsqrt(var)

    x = x_ref[0]                                                  # (Bc, Lp)

    # 1x1 conv B -> H (f32 MXU), PReLU, cumulative norm, zero padded lanes.
    h = jnp.dot(w1, x, precision=lax.Precision.HIGHEST,
                preferred_element_type=jnp.float32) + b1
    h = jnp.where(h > 0, h, a1 * h)
    h = jnp.where(valid, cum_norm(h), 0.0)   # single mask replaces per-tap masks

    # Depthwise dilated 'same' conv: unmasked rolled taps (wrap lands only in
    # zeroed / discarded lanes because Lp >= L + dil*(P-1)).
    y = None
    for p in range(P):
        off = p * dil - pad_left
        shifted = h if off == 0 else pltpu.roll(h, shift=(-off) % Lp, axis=1)
        term = dw_cols[p] * shifted
        y = term if y is None else y + term
    y = y + db

    # PReLU 2 + cumulative norm.
    g = jnp.where(y > 0, y, a2 * y)
    g = cum_norm(g)

    # Fused (out || skip) 1x1 projection, residual add and split in-kernel.
    z = jnp.dot(wcat, g, precision=lax.Precision.HIGHEST,
                preferred_element_type=jnp.float32) + bcat
    out_ref[0] = (z[:Bc, :] + x).astype(out_ref.dtype)
    skip_ref[0] = z[Bc:, :].astype(skip_ref.dtype)


def one_d_conv_block(x, params, *, P, dilation):
    batch, Bc, L = x.shape
    Sc = params["wskip"].shape[0]
    H = params["w1"].shape[0]
    dil = 2 ** (dilation - 1)
    total_pad = dil * (P - 1)
    pad_left = total_pad // 2            # torch padding='same' (zeros)

    # Lane-dense length, with enough slack that depthwise roll wrap-around only
    # touches zeroed / discarded lanes.
    Lp = ((max(L + total_pad, LANE) + LANE - 1) // LANE) * LANE

    xk = x.astype(jnp.float32)
    if Lp != L:
        xk = jnp.pad(xk, ((0, 0), (0, 0), (0, Lp - L)))

    # Fuse the out/skip 1x1 projections into a single (Bc+Sc, H) matmul.
    wcat = jnp.concatenate([params["wout"], params["wskip"]], axis=0)
    bcat = jnp.concatenate([params["bout"], params["bskip"]], axis=0)

    weights = [params["w1"], params["b1"], params["a1"], params["a2"],
               params["dw"], params["db"], wcat, bcat]

    kernel = functools.partial(_block_kernel, dil=dil, pad_left=pad_left,
                               P=P, L_valid=L, Bc=Bc)

    weight_bytes = 4 * sum(int(w.size) for w in weights)
    cost = pl.CostEstimate(
        flops=int(batch * Lp * (2 * H * Bc + 2 * (Bc + Sc) * H + H * (2 * P + 32))),
        transcendentals=int(batch * 2 * Lp),
        bytes_accessed=int(4 * batch * Lp * (2 * Bc + Sc) + batch * weight_bytes),
    )

    out_p, skip_p = pl.pallas_call(
        kernel,
        out_shape=(jax.ShapeDtypeStruct((batch, Bc, Lp), jnp.float32),
                   jax.ShapeDtypeStruct((batch, Sc, Lp), jnp.float32)),
        grid=(batch,),
        in_specs=[pl.BlockSpec((1, Bc, Lp), lambda b: (b, 0, 0))]
                 + [pl.BlockSpec(w.shape, lambda b: (0, 0)) for w in weights],
        out_specs=(pl.BlockSpec((1, Bc, Lp), lambda b: (b, 0, 0)),
                   pl.BlockSpec((1, Sc, Lp), lambda b: (b, 0, 0))),
        compiler_params=pltpu.CompilerParams(
            dimension_semantics=("parallel",),
            vmem_limit_bytes=64 * 1024 * 1024),
        cost_estimate=cost,
    )(xk, *weights)

    return out_p[:, :, :L], skip_p[:, :, :L]


# ------------------- pure-f32 JAX reference (torch semantics) -------------------
def ref_forward(x, params, *, P, dilation):
    w1 = params["w1"]; b1 = params["b1"][:, 0]
    a1 = params["a1"][0, 0]; a2 = params["a2"][0, 0]
    dw = params["dw"]; db = params["db"][:, 0]
    wout = params["wout"]; bout = params["bout"][:, 0]
    wskip = params["wskip"]; bskip = params["bskip"][:, 0]
    _, _, L = x.shape
    hi = lax.Precision.HIGHEST

    def cum_norm(v):
        N = v.shape[1]
        cnt = N * (jnp.arange(L, dtype=jnp.float32) + 1.0)
        s1 = jnp.cumsum(jnp.sum(v, axis=1), axis=-1)
        s2 = jnp.cumsum(jnp.sum(v * v, axis=1), axis=-1)
        mean = s1 / cnt
        var = s2 / cnt - mean ** 2
        return (v - mean[:, None, :]) / jnp.sqrt(var[:, None, :])

    h = jnp.einsum('hb,nbl->nhl', w1, x, precision=hi) + b1[None, :, None]
    h = jnp.where(h > 0, h, a1 * h)
    h = cum_norm(h)

    d = 2 ** (dilation - 1)
    total = d * (P - 1); left = total // 2; right = total - left
    hp = jnp.pad(h, ((0, 0), (0, 0), (left, right)))
    y = jnp.zeros_like(h)
    for p in range(P):
        y = y + dw[None, :, p:p + 1] * hp[:, :, p * d: p * d + L]
    y = y + db[None, :, None]

    h = jnp.where(y > 0, y, a2 * y)
    h = cum_norm(h)

    out = jnp.einsum('bh,nhl->nbl', wout, h, precision=hi) + bout[None, :, None] + x
    skip = jnp.einsum('sh,nhl->nsl', wskip, h, precision=hi) + bskip[None, :, None]
    return out, skip


if __name__ == "__main__":
    batch, Bc, H, P, Sc, L, dilation = 2, 4, 8, 3, 4, 16, 2

    key = jax.random.PRNGKey(0)
    kx, kw1, kb1, kdw, kdb, kwo, kbo, kws, kbs = jax.random.split(key, 9)
    x = jax.random.normal(kx, (batch, Bc, L), jnp.float32)
    params = {
        "w1": jax.random.normal(kw1, (H, Bc), jnp.float32) * 0.3,
        "b1": (jax.random.normal(kb1, (H,), jnp.float32) * 0.1).reshape(H, 1),
        "a1": jnp.full((1, 1), 0.25, jnp.float32),   # PReLU(num_parameters=1, init=0.25)
        "a2": jnp.full((1, 1), 0.25, jnp.float32),
        "dw": jax.random.normal(kdw, (H, P), jnp.float32) * 0.3,
        "db": (jax.random.normal(kdb, (H,), jnp.float32) * 0.1).reshape(H, 1),
        "wout": jax.random.normal(kwo, (Bc, H), jnp.float32) * 0.3,
        "bout": (jax.random.normal(kbo, (Bc,), jnp.float32) * 0.1).reshape(Bc, 1),
        "wskip": jax.random.normal(kws, (Sc, H), jnp.float32) * 0.3,
        "bskip": (jax.random.normal(kbs, (Sc,), jnp.float32) * 0.1).reshape(Sc, 1),
    }

    out, skip = one_d_conv_block(x, params, P=P, dilation=dilation)
    jax.block_until_ready((out, skip))

    out_r, skip_r = ref_forward(x, params, P=P, dilation=dilation)
    assert out.shape == (batch, Bc, L) and skip.shape == (batch, Sc, L)
    assert jnp.allclose(out, out_r, atol=1e-3, rtol=1e-3), "out mismatch"
    assert jnp.allclose(skip, skip_r, atol=1e-3, rtol=1e-3), "skip mismatch"
    print("KERNEL_OK")
</pallas_src>

<mosaic_0001>
module attributes {stable_mosaic.version = 11 : i64} {
  func.func @_block_kernel(%arg0: i32, %arg1: memref<1x4x128xf32, #tpu.memory_space<vmem>>, %arg2: memref<8x4xf32, #tpu.memory_space<vmem>>, %arg3: memref<8x1xf32, #tpu.memory_space<vmem>>, %arg4: memref<1x1xf32, #tpu.memory_space<vmem>>, %arg5: memref<1x1xf32, #tpu.memory_space<vmem>>, %arg6: memref<8x3xf32, #tpu.memory_space<vmem>>, %arg7: memref<8x1xf32, #tpu.memory_space<vmem>>, %arg8: memref<8x8xf32, #tpu.memory_space<vmem>>, %arg9: memref<8x1xf32, #tpu.memory_space<vmem>>, %arg10: memref<1x4x128xf32, #tpu.memory_space<vmem>>, %arg11: memref<1x4x128xf32, #tpu.memory_space<vmem>>) attributes {dimension_semantics = [#tpu.dimension_semantics<parallel>], iteration_bounds = array<i64: 2>, scalar_prefetch = 0 : i64, scratch_operands = 0 : i64, tpu.core_type = #tpu.core_type<tc>, window_params = [{transform_indices = @transform_0, window_bounds = array<i64: 1, 4, 128>}, {pipeline_mode = #tpu.pipeline_mode<synchronous>, transform_indices = @transform_1, window_bounds = array<i64: 8, 4>}, {pipeline_mode = #tpu.pipeline_mode<synchronous>, transform_indices = @transform_2, window_bounds = array<i64: 8, 1>}, {pipeline_mode = #tpu.pipeline_mode<synchronous>, transform_indices = @transform_3, window_bounds = array<i64: 1, 1>}, {pipeline_mode = #tpu.pipeline_mode<synchronous>, transform_indices = @transform_4, window_bounds = array<i64: 1, 1>}, {pipeline_mode = #tpu.pipeline_mode<synchronous>, transform_indices = @transform_5, window_bounds = array<i64: 8, 3>}, {pipeline_mode = #tpu.pipeline_mode<synchronous>, transform_indices = @transform_6, window_bounds = array<i64: 8, 1>}, {pipeline_mode = #tpu.pipeline_mode<synchronous>, transform_indices = @transform_7, window_bounds = array<i64: 8, 8>}, {pipeline_mode = #tpu.pipeline_mode<synchronous>, transform_indices = @transform_8, window_bounds = array<i64: 8, 1>}, {transform_indices = @transform_9, window_bounds = array<i64: 1, 4, 128>}, {transform_indices = @transform_10, window_bounds = array<i64: 1, 4, 128>}]} {
    %0 = tpu.iota {dimensions = array<i32: 1>} : vector<1x128xi32>
    %c1_i32 = arith.constant 1 : i32
    %1 = vector.broadcast %c1_i32 : i32 to vector<1x128xi32>
    %2 = arith.addi %0, %1 : vector<1x128xi32>
    %3 = arith.sitofp %2 : vector<1x128xi32> to vector<1x128xf32>
    %cst = arith.constant 8.000000e+00 : f32
    %4 = vector.broadcast %cst : f32 to vector<1x128xf32>
    %5 = arith.mulf %3, %4 : vector<1x128xf32>
    %cst_0 = arith.constant 1.000000e+00 : f32
    %6 = vector.broadcast %cst_0 : f32 to vector<1x128xf32>
    %7 = arith.divf %6, %5 : vector<1x128xf32>
    %c16_i32 = arith.constant 16 : i32
    %8 = vector.broadcast %c16_i32 : i32 to vector<1x128xi32>
    %9 = arith.cmpi slt, %0, %8 : vector<1x128xi32>
    %c1_i32_1 = arith.constant 1 : i32
    %10 = vector.broadcast %c1_i32_1 : i32 to vector<1x128xi32>
    %11 = arith.cmpi sge, %0, %10 : vector<1x128xi32>
    %c2_i32 = arith.constant 2 : i32
    %12 = vector.broadcast %c2_i32 : i32 to vector<1x128xi32>
    %13 = arith.cmpi sge, %0, %12 : vector<1x128xi32>
    %c4_i32 = arith.constant 4 : i32
    %14 = vector.broadcast %c4_i32 : i32 to vector<1x128xi32>
    %15 = arith.cmpi sge, %0, %14 : vector<1x128xi32>
    %c8_i32 = arith.constant 8 : i32
    %16 = vector.broadcast %c8_i32 : i32 to vector<1x128xi32>
    %17 = arith.cmpi sge, %0, %16 : vector<1x128xi32>
    %c16_i32_2 = arith.constant 16 : i32
    %18 = vector.broadcast %c16_i32_2 : i32 to vector<1x128xi32>
    %19 = arith.cmpi sge, %0, %18 : vector<1x128xi32>
    %c32_i32 = arith.constant 32 : i32
    %20 = vector.broadcast %c32_i32 : i32 to vector<1x128xi32>
    %21 = arith.cmpi sge, %0, %20 : vector<1x128xi32>
    %c64_i32 = arith.constant 64 : i32
    %22 = vector.broadcast %c64_i32 : i32 to vector<1x128xi32>
    %23 = arith.cmpi sge, %0, %22 : vector<1x128xi32>
    %c0 = arith.constant 0 : index
    %c0_3 = arith.constant 0 : index
    %24 = vector.load %arg2[%c0, %c0_3] : memref<8x4xf32, #tpu.memory_space<vmem>>, vector<8x4xf32>
    %c0_4 = arith.constant 0 : index
    %c0_5 = arith.constant 0 : index
    %25 = vector.load %arg8[%c0_4, %c0_5] : memref<8x8xf32, #tpu.memory_space<vmem>>, vector<8x8xf32>
    %c0_6 = arith.constant 0 : index
    %c0_7 = arith.constant 0 : index
    %26 = vector.load %arg3[%c0_6, %c0_7] : memref<8x1xf32, #tpu.memory_space<vmem>>, vector<8x1xf32>
    %c0_8 = arith.constant 0 : index
    %c0_9 = arith.constant 0 : index
    %27 = vector.load %arg9[%c0_8, %c0_9] : memref<8x1xf32, #tpu.memory_space<vmem>>, vector<8x1xf32>
    %c0_10 = arith.constant 0 : index
    %c0_11 = arith.constant 0 : index
    %28 = vector.load %arg7[%c0_10, %c0_11] : memref<8x1xf32, #tpu.memory_space<vmem>>, vector<8x1xf32>
    %c0_12 = arith.constant 0 : index
    %c0_13 = arith.constant 0 : index
    %29 = vector.load %arg4[%c0_12, %c0_13] : memref<1x1xf32, #tpu.memory_space<vmem>>, vector<1x1xf32>
    %c0_14 = arith.constant 0 : index
    %c0_15 = arith.constant 0 : index
    %30 = vector.load %arg5[%c0_14, %c0_15] : memref<1x1xf32, #tpu.memory_space<vmem>>, vector<1x1xf32>
    %c0_16 = arith.constant 0 : index
    %c0_17 = arith.constant 0 : index
    %31 = vector.load %arg6[%c0_16, %c0_17] : memref<8x3xf32, #tpu.memory_space<vmem>>, vector<8x1xf32>
    %c0_18 = arith.constant 0 : index
    %c1 = arith.constant 1 : index
    %32 = vector.load %arg6[%c0_18, %c1] : memref<8x3xf32, #tpu.memory_space<vmem>>, vector<8x1xf32>
    %c0_19 = arith.constant 0 : index
    %c2 = arith.constant 2 : index
    %33 = vector.load %arg6[%c0_19, %c2] : memref<8x3xf32, #tpu.memory_space<vmem>>, vector<8x1xf32>
    %c0_20 = arith.constant 0 : index
    %c0_21 = arith.constant 0 : index
    %c0_22 = arith.constant 0 : index
    %34 = vector.load %arg1[%c0_20, %c0_21, %c0_22] : memref<1x4x128xf32, #tpu.memory_space<vmem>>, vector<1x4x128xf32>
    %35 = vector.shape_cast %34 : vector<1x4x128xf32> to vector<4x128xf32>
    %cst_23 = arith.constant dense<0.000000e+00> : vector<8x128xf32>
    %36 = tpu.matmul %24, %35, %cst_23 {dimension_numbers = #tpu.dot_dimension_numbers<[1], [0], [0], [1], [0, 0, 1, 1], [], []>, precision = #tpu.contract_precision<fp32>} : vector<8x4xf32>, vector<4x128xf32>, vector<8x128xf32> -> vector<8x128xf32>
    %37 = vector.broadcast %26 : vector<8x1xf32> to vector<8x128xf32>
    %38 = arith.addf %36, %37 : vector<8x128xf32>
    %cst_24 = arith.constant 0.000000e+00 : f32
    %39 = vector.broadcast %cst_24 : f32 to vector<8x128xf32>
    %40 = arith.cmpf ogt, %38, %39 : vector<8x128xf32>
    %41 = vector.broadcast %29 : vector<1x1xf32> to vector<8x128xf32>
    %42 = arith.mulf %41, %38 : vector<8x128xf32>
    %43 = arith.select %40, %38, %42 : vector<8x128xi1>, vector<8x128xf32>
    %cst_25 = arith.constant dense<0.000000e+00> : vector<128xf32>
    %44 = vector.multi_reduction <add>, %43, %cst_25 [0] : vector<8x128xf32> to vector<128xf32>
    %45 = vector.shape_cast %44 : vector<128xf32> to vector<1x128xf32>
    %46 = arith.mulf %43, %43 : vector<8x128xf32>
    %cst_26 = arith.constant dense<0.000000e+00> : vector<128xf32>
    %47 = vector.multi_reduction <add>, %46, %cst_26 [0] : vector<8x128xf32> to vector<128xf32>
    %48 = vector.shape_cast %47 : vector<128xf32> to vector<1x128xf32>
    %49 = tpu.concatenate %45, %48 in 0 : vector<1x128xf32>, vector<1x128xf32> -> vector<2x128xf32>
    %c1_i32_27 = arith.constant 1 : i32
    %50 = tpu.dynamic_rotate %49 by %c1_i32_27 dim 1 : vector<2x128xf32>, i32 -> vector<2x128xf32>
    %cst_28 = arith.constant 0.000000e+00 : f32
    %51 = vector.shape_cast %11 : vector<1x128xi1> to vector<1x128xi1>
    %52 = vector.broadcast %51 : vector<1x128xi1> to vector<2x128xi1>
    %53 = vector.broadcast %cst_28 : f32 to vector<2x128xf32>
    %54 = arith.select %52, %50, %53 : vector<2x128xi1>, vector<2x128xf32>
    %55 = arith.addf %49, %54 : vector<2x128xf32>
    %c2_i32_29 = arith.constant 2 : i32
    %56 = tpu.dynamic_rotate %55 by %c2_i32_29 dim 1 : vector<2x128xf32>, i32 -> vector<2x128xf32>
    %cst_30 = arith.constant 0.000000e+00 : f32
    %57 = vector.shape_cast %13 : vector<1x128xi1> to vector<1x128xi1>
    %58 = vector.broadcast %57 : vector<1x128xi1> to vector<2x128xi1>
    %59 = vector.broadcast %cst_30 : f32 to vector<2x128xf32>
    %60 = arith.select %58, %56, %59 : vector<2x128xi1>, vector<2x128xf32>
    %61 = arith.addf %55, %60 : vector<2x128xf32>
    %c4_i32_31 = arith.constant 4 : i32
    %62 = tpu.dynamic_rotate %61 by %c4_i32_31 dim 1 : vector<2x128xf32>, i32 -> vector<2x128xf32>
    %cst_32 = arith.constant 0.000000e+00 : f32
    %63 = vector.shape_cast %15 : vector<1x128xi1> to vector<1x128xi1>
    %64 = vector.broadcast %63 : vector<1x128xi1> to vector<2x128xi1>
    %65 = vector.broadcast %cst_32 : f32 to vector<2x128xf32>
    %66 = arith.select %64, %62, %65 : vector<2x128xi1>, vector<2x128xf32>
    %67 = arith.addf %61, %66 : vector<2x128xf32>
    %c8_i32_33 = arith.constant 8 : i32
    %68 = tpu.dynamic_rotate %67 by %c8_i32_33 dim 1 : vector<2x128xf32>, i32 -> vector<2x128xf32>
    %cst_34 = arith.constant 0.000000e+00 : f32
    %69 = vector.shape_cast %17 : vector<1x128xi1> to vector<1x128xi1>
    %70 = vector.broadcast %69 : vector<1x128xi1> to vector<2x128xi1>
    %71 = vector.broadcast %cst_34 : f32 to vector<2x128xf32>
    %72 = arith.select %70, %68, %71 : vector<2x128xi1>, vector<2x128xf32>
    %73 = arith.addf %67, %72 : vector<2x128xf32>
    %c16_i32_35 = arith.constant 16 : i32
    %74 = tpu.dynamic_rotate %73 by %c16_i32_35 dim 1 : vector<2x128xf32>, i32 -> vector<2x128xf32>
    %cst_36 = arith.constant 0.000000e+00 : f32
    %75 = vector.shape_cast %19 : vector<1x128xi1> to vector<1x128xi1>
    %76 = vector.broadcast %75 : vector<1x128xi1> to vector<2x128xi1>
    %77 = vector.broadcast %cst_36 : f32 to vector<2x128xf32>
    %78 = arith.select %76, %74, %77 : vector<2x128xi1>, vector<2x128xf32>
    %79 = arith.addf %73, %78 : vector<2x128xf32>
    %c32_i32_37 = arith.constant 32 : i32
    %80 = tpu.dynamic_rotate %79 by %c32_i32_37 dim 1 : vector<2x128xf32>, i32 -> vector<2x128xf32>
    %cst_38 = arith.constant 0.000000e+00 : f32
    %81 = vector.shape_cast %21 : vector<1x128xi1> to vector<1x128xi1>
    %82 = vector.broadcast %81 : vector<1x128xi1> to vector<2x128xi1>
    %83 = vector.broadcast %cst_38 : f32 to vector<2x128xf32>
    %84 = arith.select %82, %80, %83 : vector<2x128xi1>, vector<2x128xf32>
    %85 = arith.addf %79, %84 : vector<2x128xf32>
    %c64_i32_39 = arith.constant 64 : i32
    %86 = tpu.dynamic_rotate %85 by %c64_i32_39 dim 1 : vector<2x128xf32>, i32 -> vector<2x128xf32>
    %cst_40 = arith.constant 0.000000e+00 : f32
    %87 = vector.shape_cast %23 : vector<1x128xi1> to vector<1x128xi1>
    %88 = vector.broadcast %87 : vector<1x128xi1> to vector<2x128xi1>
    %89 = vector.broadcast %cst_40 : f32 to vector<2x128xf32>
    %90 = arith.select %88, %86, %89 : vector<2x128xi1>, vector<2x128xf32>
    %91 = arith.addf %85, %90 : vector<2x128xf32>
    %92 = vector.extract_strided_slice %91 {offsets = [0, 0], sizes = [1, 128], strides = [1, 1]} : vector<2x128xf32> to vector<1x128xf32>
    %93 = arith.mulf %92, %7 : vector<1x128xf32>
    %94 = vector.extract_strided_slice %91 {offsets = [1, 0], sizes = [1, 128], strides = [1, 1]} : vector<2x128xf32> to vector<1x128xf32>
    %95 = arith.mulf %94, %7 : vector<1x128xf32>
    %96 = arith.mulf %93, %93 : vector<1x128xf32>
    %97 = arith.subf %95, %96 : vector<1x128xf32>
    %98 = vector.broadcast %93 : vector<1x128xf32> to vector<8x128xf32>
    %99 = arith.subf %43, %98 : vector<8x128xf32>
    %100 = math.rsqrt %97 : vector<1x128xf32>
    %101 = vector.broadcast %100 : vector<1x128xf32> to vector<8x128xf32>
    %102 = arith.mulf %99, %101 : vector<8x128xf32>
    %cst_41 = arith.constant 0.000000e+00 : f32
    %103 = vector.shape_cast %9 : vector<1x128xi1> to vector<1x128xi1>
    %104 = vector.broadcast %103 : vector<1x128xi1> to vector<8x128xi1>
    %105 = vector.broadcast %cst_41 : f32 to vector<8x128xf32>
    %106 = arith.select %104, %102, %105 : vector<8x128xi1>, vector<8x128xf32>
    %c2_i32_42 = arith.constant 2 : i32
    %107 = tpu.dynamic_rotate %106 by %c2_i32_42 dim 1 : vector<8x128xf32>, i32 -> vector<8x128xf32>
    %108 = vector.broadcast %31 : vector<8x1xf32> to vector<8x128xf32>
    %109 = arith.mulf %108, %107 : vector<8x128xf32>
    %110 = vector.broadcast %32 : vector<8x1xf32> to vector<8x128xf32>
    %111 = arith.mulf %110, %106 : vector<8x128xf32>
    %112 = arith.addf %109, %111 : vector<8x128xf32>
    %c126_i32 = arith.constant 126 : i32
    %113 = tpu.dynamic_rotate %106 by %c126_i32 dim 1 : vector<8x128xf32>, i32 -> vector<8x128xf32>
    %114 = vector.broadcast %33 : vector<8x1xf32> to vector<8x128xf32>
    %115 = arith.mulf %114, %113 : vector<8x128xf32>
    %116 = arith.addf %112, %115 : vector<8x128xf32>
    %117 = vector.broadcast %28 : vector<8x1xf32> to vector<8x128xf32>
    %118 = arith.addf %116, %117 : vector<8x128xf32>
    %cst_43 = arith.constant 0.000000e+00 : f32
    %119 = vector.broadcast %cst_43 : f32 to vector<8x128xf32>
    %120 = arith.cmpf ogt, %118, %119 : vector<8x128xf32>
    %121 = vector.broadcast %30 : vector<1x1xf32> to vector<8x128xf32>
    %122 = arith.mulf %121, %118 : vector<8x128xf32>
    %123 = arith.select %120, %118, %122 : vector<8x128xi1>, vector<8x128xf32>
    %cst_44 = arith.constant dense<0.000000e+00> : vector<128xf32>
    %124 = vector.multi_reduction <add>, %123, %cst_44 [0] : vector<8x128xf32> to vector<128xf32>
    %125 = vector.shape_cast %124 : vector<128xf32> to vector<1x128xf32>
    %126 = arith.mulf %123, %123 : vector<8x128xf32>
    %cst_45 = arith.constant dense<0.000000e+00> : vector<128xf32>
    %127 = vector.multi_reduction <add>, %126, %cst_45 [0] : vector<8x128xf32> to vector<128xf32>
    %128 = vector.shape_cast %127 : vector<128xf32> to vector<1x128xf32>
    %129 = tpu.concatenate %125, %128 in 0 : vector<1x128xf32>, vector<1x128xf32> -> vector<2x128xf32>
    %c1_i32_46 = arith.constant 1 : i32
    %130 = tpu.dynamic_rotate %129 by %c1_i32_46 dim 1 : vector<2x128xf32>, i32 -> vector<2x128xf32>
    %cst_47 = arith.constant 0.000000e+00 : f32
    %131 = vector.shape_cast %11 : vector<1x128xi1> to vector<1x128xi1>
    %132 = vector.broadcast %131 : vector<1x128xi1> to vector<2x128xi1>
    %133 = vector.broadcast %cst_47 : f32 to vector<2x128xf32>
    %134 = arith.select %132, %130, %133 : vector<2x128xi1>, vector<2x128xf32>
    %135 = arith.addf %129, %134 : vector<2x128xf32>
    %c2_i32_48 = arith.constant 2 : i32
    %136 = tpu.dynamic_rotate %135 by %c2_i32_48 dim 1 : vector<2x128xf32>, i32 -> vector<2x128xf32>
    %cst_49 = arith.constant 0.000000e+00 : f32
    %137 = vector.shape_cast %13 : vector<1x128xi1> to vector<1x128xi1>
    %138 = vector.broadcast %137 : vector<1x128xi1> to vector<2x128xi1>
    %139 = vector.broadcast %cst_49 : f32 to vector<2x128xf32>
    %140 = arith.select %138, %136, %139 : vector<2x128xi1>, vector<2x128xf32>
    %141 = arith.addf %135, %140 : vector<2x128xf32>
    %c4_i32_50 = arith.constant 4 : i32
    %142 = tpu.dynamic_rotate %141 by %c4_i32_50 dim 1 : vector<2x128xf32>, i32 -> vector<2x128xf32>
    %cst_51 = arith.constant 0.000000e+00 : f32
    %143 = vector.shape_cast %15 : vector<1x128xi1> to vector<1x128xi1>
    %144 = vector.broadcast %143 : vector<1x128xi1> to vector<2x128xi1>
    %145 = vector.broadcast %cst_51 : f32 to vector<2x128xf32>
    %146 = arith.select %144, %142, %145 : vector<2x128xi1>, vector<2x128xf32>
    %147 = arith.addf %141, %146 : vector<2x128xf32>
    %c8_i32_52 = arith.constant 8 : i32
    %148 = tpu.dynamic_rotate %147 by %c8_i32_52 dim 1 : vector<2x128xf32>, i32 -> vector<2x128xf32>
    %cst_53 = arith.constant 0.000000e+00 : f32
    %149 = vector.shape_cast %17 : vector<1x128xi1> to vector<1x128xi1>
    %150 = vector.broadcast %149 : vector<1x128xi1> to vector<2x128xi1>
    %151 = vector.broadcast %cst_53 : f32 to vector<2x128xf32>
    %152 = arith.select %150, %148, %151 : vector<2x128xi1>, vector<2x128xf32>
    %153 = arith.addf %147, %152 : vector<2x128xf32>
    %c16_i32_54 = arith.constant 16 : i32
    %154 = tpu.dynamic_rotate %153 by %c16_i32_54 dim 1 : vector<2x128xf32>, i32 -> vector<2x128xf32>
    %cst_55 = arith.constant 0.000000e+00 : f32
    %155 = vector.shape_cast %19 : vector<1x128xi1> to vector<1x128xi1>
    %156 = vector.broadcast %155 : vector<1x128xi1> to vector<2x128xi1>
    %157 = vector.broadcast %cst_55 : f32 to vector<2x128xf32>
    %158 = arith.select %156, %154, %157 : vector<2x128xi1>, vector<2x128xf32>
    %159 = arith.addf %153, %158 : vector<2x128xf32>
    %c32_i32_56 = arith.constant 32 : i32
    %160 = tpu.dynamic_rotate %159 by %c32_i32_56 dim 1 : vector<2x128xf32>, i32 -> vector<2x128xf32>
    %cst_57 = arith.constant 0.000000e+00 : f32
    %161 = vector.shape_cast %21 : vector<1x128xi1> to vector<1x128xi1>
    %162 = vector.broadcast %161 : vector<1x128xi1> to vector<2x128xi1>
    %163 = vector.broadcast %cst_57 : f32 to vector<2x128xf32>
    %164 = arith.select %162, %160, %163 : vector<2x128xi1>, vector<2x128xf32>
    %165 = arith.addf %159, %164 : vector<2x128xf32>
    %c64_i32_58 = arith.constant 64 : i32
    %166 = tpu.dynamic_rotate %165 by %c64_i32_58 dim 1 : vector<2x128xf32>, i32 -> vector<2x128xf32>
    %cst_59 = arith.constant 0.000000e+00 : f32
    %167 = vector.shape_cast %23 : vector<1x128xi1> to vector<1x128xi1>
    %168 = vector.broadcast %167 : vector<1x128xi1> to vector<2x128xi1>
    %169 = vector.broadcast %cst_59 : f32 to vector<2x128xf32>
    %170 = arith.select %168, %166, %169 : vector<2x128xi1>, vector<2x128xf32>
    %171 = arith.addf %165, %170 : vector<2x128xf32>
    %172 = vector.extract_strided_slice %171 {offsets = [0, 0], sizes = [1, 128], strides = [1, 1]} : vector<2x128xf32> to vector<1x128xf32>
    %173 = arith.mulf %172, %7 : vector<1x128xf32>
    %174 = vector.extract_strided_slice %171 {offsets = [1, 0], sizes = [1, 128], strides = [1, 1]} : vector<2x128xf32> to vector<1x128xf32>
    %175 = arith.mulf %174, %7 : vector<1x128xf32>
    %176 = arith.mulf %173, %173 : vector<1x128xf32>
    %177 = arith.subf %175, %176 : vector<1x128xf32>
    %178 = vector.broadcast %173 : vector<1x128xf32> to vector<8x128xf32>
    %179 = arith.subf %123, %178 : vector<8x128xf32>
    %180 = math.rsqrt %177 : vector<1x128xf32>
    %181 = vector.broadcast %180 : vector<1x128xf32> to vector<8x128xf32>
    %182 = arith.mulf %179, %181 : vector<8x128xf32>
    %cst_60 = arith.constant dense<0.000000e+00> : vector<8x128xf32>
    %183 = tpu.matmul %25, %182, %cst_60 {dimension_numbers = #tpu.dot_dimension_numbers<[1], [0], [0], [1], [0, 0, 1, 1], [], []>, precision = #tpu.contract_precision<fp32>} : vector<8x8xf32>, vector<8x128xf32>, vector<8x128xf32> -> vector<8x128xf32>
    %184 = vector.broadcast %27 : vector<8x1xf32> to vector<8x128xf32>
    %185 = arith.addf %183, %184 : vector<8x128xf32>
    %186 = vector.extract_strided_slice %185 {offsets = [0, 0], sizes = [4, 128], strides = [1, 1]} : vector<8x128xf32> to vector<4x128xf32>
    %187 = arith.addf %186, %35 : vector<4x128xf32>
    %c0_61 = arith.constant 0 : index
    %c0_62 = arith.constant 0 : index
    %c0_63 = arith.constant 0 : index
    %188 = vector.load %arg10[%c0_61, %c0_62, %c0_63] : memref<1x4x128xf32, #tpu.memory_space<vmem>>, vector<1x4x128xf32>
    %189 = vector.shape_cast %188 : vector<1x4x128xf32> to vector<4x128xf32>
    %190 = vector.shape_cast %187 : vector<4x128xf32> to vector<1x4x128xf32>
    tpu.vector_store %arg10[%c0_61, %c0_62, %c0_63], %190 {strides = array<i32>} : memref<1x4x128xf32, #tpu.memory_space<vmem>>, vector<1x4x128xf32>,
    %191 = vector.extract_strided_slice %185 {offsets = [4, 0], sizes = [4, 128], strides = [1, 1]} : vector<8x128xf32> to vector<4x128xf32>
    %c0_64 = arith.constant 0 : index
    %c0_65 = arith.constant 0 : index
    %c0_66 = arith.constant 0 : index
    %192 = vector.load %arg11[%c0_64, %c0_65, %c0_66] : memref<1x4x128xf32, #tpu.memory_space<vmem>>, vector<1x4x128xf32>
    %193 = vector.shape_cast %192 : vector<1x4x128xf32> to vector<4x128xf32>
    %194 = vector.shape_cast %191 : vector<4x128xf32> to vector<1x4x128xf32>
    tpu.vector_store %arg11[%c0_64, %c0_65, %c0_66], %194 {strides = array<i32>} : memref<1x4x128xf32, #tpu.memory_space<vmem>>, vector<1x4x128xf32>,
    return
  }
  func.func @transform_0(%arg0: i32) -> (i32, i32, i32) {
    %c0_i32 = arith.constant 0 : i32
    %c0_i32_0 = arith.constant 0 : i32
    %c0_i32_1 = arith.constant 0 : i32
    return %arg0, %c0_i32, %c0_i32_0 : i32, i32, i32
  }
  func.func @transform_1(%arg0: i32) -> (i32, i32) {
    %c0_i32 = arith.constant 0 : i32
    %c0_i32_0 = arith.constant 0 : i32
    %c0_i32_1 = arith.constant 0 : i32
    return %c0_i32, %c0_i32_0 : i32, i32
  }
  func.func @transform_2(%arg0: i32) -> (i32, i32) {
    %c0_i32 = arith.constant 0 : i32
    %c0_i32_0 = arith.constant 0 : i32
    %c0_i32_1 = arith.constant 0 : i32
    return %c0_i32, %c0_i32_0 : i32, i32
  }
  func.func @transform_3(%arg0: i32) -> (i32, i32) {
    %c0_i32 = arith.constant 0 : i32
    %c0_i32_0 = arith.constant 0 : i32
    %c0_i32_1 = arith.constant 0 : i32
    return %c0_i32, %c0_i32_0 : i32, i32
  }
  func.func @transform_4(%arg0: i32) -> (i32, i32) {
    %c0_i32 = arith.constant 0 : i32
    %c0_i32_0 = arith.constant 0 : i32
    %c0_i32_1 = arith.constant 0 : i32
    return %c0_i32, %c0_i32_0 : i32, i32
  }
  func.func @transform_5(%arg0: i32) -> (i32, i32) {
    %c0_i32 = arith.constant 0 : i32
    %c0_i32_0 = arith.constant 0 : i32
    %c0_i32_1 = arith.constant 0 : i32
    return %c0_i32, %c0_i32_0 : i32, i32
  }
  func.func @transform_6(%arg0: i32) -> (i32, i32) {
    %c0_i32 = arith.constant 0 : i32
    %c0_i32_0 = arith.constant 0 : i32
    %c0_i32_1 = arith.constant 0 : i32
    return %c0_i32, %c0_i32_0 : i32, i32
  }
  func.func @transform_7(%arg0: i32) -> (i32, i32) {
    %c0_i32 = arith.constant 0 : i32
    %c0_i32_0 = arith.constant 0 : i32
    %c0_i32_1 = arith.constant 0 : i32
    return %c0_i32, %c0_i32_0 : i32, i32
  }
  func.func @transform_8(%arg0: i32) -> (i32, i32) {
    %c0_i32 = arith.constant 0 : i32
    %c0_i32_0 = arith.constant 0 : i32
    %c0_i32_1 = arith.constant 0 : i32
    return %c0_i32, %c0_i32_0 : i32, i32
  }
  func.func @transform_9(%arg0: i32) -> (i32, i32, i32) {
    %c0_i32 = arith.constant 0 : i32
    %c0_i32_0 = arith.constant 0 : i32
    %c0_i32_1 = arith.constant 0 : i32
    return %arg0, %c0_i32, %c0_i32_0 : i32, i32, i32
  }
  func.func @transform_10(%arg0: i32) -> (i32, i32, i32) {
    %c0_i32 = arith.constant 0 : i32
    %c0_i32_0 = arith.constant 0 : i32
    %c0_i32_1 = arith.constant 0 : i32
    return %arg0, %c0_i32, %c0_i32_0 : i32, i32, i32
  }
}

</mosaic_0001>

<llo_original>
// kernel: tpu_custom_call.1
$region0: #{tpu_custom_call.1}
  #allocation0 [shape = 'u32[]', space=smem, size = 0x4, offset = 0x4, fixed_abs, tag = 'smem constant byte address 0x4 - core index']
  #allocation1 [shape = 'u32[72,128]{1,0:T(1,128)}', space=vmem, size = 0x9000, scoped, tag = 'internal scratch']
  #allocation2 [shape = 'f32[1,1]{1,0:T(1,128)S(1)}', space=vmem, size = 0x200, scoped, tag = 'scoped memory for tpu_custom_call.1']
  #allocation3 [shape = 'f32[1,1]{1,0:T(1,128)S(1)}', space=vmem, size = 0x200, scoped, tag = 'scoped memory for tpu_custom_call.1']
  %s0 = inlined_call_operand.vmem [shape: f32[2,4,128], index: 0, kind: input, shape index: {}]
  %s1 = inlined_call_operand.vmem [shape: f32[8,4], index: 1, kind: input, shape index: {}]
  %s2 = inlined_call_operand.vmem [shape: f32[8,1], index: 2, kind: input, shape index: {}]
  %s3 = inlined_call_operand.<no memory space> [shape: f32[1,1], index: 3, kind: input, shape index: {}]
  %s4 = inlined_call_operand.<no memory space> [shape: f32[1,1], index: 4, kind: input, shape index: {}]
  %s5 = inlined_call_operand.vmem [shape: f32[8,3], index: 5, kind: input, shape index: {}]
  %s6 = inlined_call_operand.vmem [shape: f32[8,1], index: 6, kind: input, shape index: {}]
  %s7 = inlined_call_operand.vmem [shape: f32[8,8], index: 7, kind: input, shape index: {}]
  %s8 = inlined_call_operand.vmem [shape: f32[8,1], index: 8, kind: input, shape index: {}]
  %s9 = inlined_call_operand.hbm [shape: f32[2,4,128], index: 9, kind: output, shape index: {0}]
  %s10 = inlined_call_operand.hbm [shape: f32[2,4,128], index: 10, kind: output, shape index: {1}]
  %11 = xla_tuple %s9, %s10
  %s12 = sld [smem:[#allocation0]]
  $region77: #{tpu_custom_call.1} parent=0
    _
  %s14 = ssub.s32 1, %s12
  %s15 = scalar_select 0, %s14, %s12
  %v16 = vstv %s3
  %17 = vst [vmem:[#allocation2] sm:$0x1] %v16
  %v18 = vstv %s4
  %19 = vst [vmem:[#allocation3] sm:$0x1] %v18
  $region1: #{tpu_custom_call.1} parent=0
    #allocation4 [shape = 'u8[4096]{0}', space=vmem, size = 0x1000, scoped, tag = 'output window, operand 0']
    #allocation5 [shape = 's32[2]{0}', space=sflag, size = 0x8, scoped, tag = 'scoped memory for tpu_custom_call.1']
    #allocation6 [shape = 'u8[4096]{0}', space=vmem, size = 0x1000, scoped, tag = 'output window, operand 1']
    #allocation7 [shape = 's32[2]{0}', space=sflag, size = 0x8, scoped, tag = 'scoped memory for tpu_custom_call.1']
    %20 = vsyncpa [#allocation5], 0
    %s21 = scalar_lea.sflag [#allocation5], 1
    %22 = vsyncpa %s21, 0
    %23 = vsyncpa [#allocation7], 0
    %s24 = scalar_lea.sflag [#allocation7], 1
    %25 = vsyncpa %s24, 0
    loop: start=0, step=1, limit=4
    $region2: #{tpu_custom_call.1} parent=1 // loop_pre_header
      _
    $region3: #{tpu_custom_call.1} parent=1 // loop_header
      %s27 = sphi 0, %s31
      %p28 = scmp.ge.s32.totalorder %s27, 4
      %s37 = sphi 0, %s39
      %s40 = sphi 0, %s37
      %s41 = sphi 0, %s40
      %s57 = sphi 0, %s41
      %s61 = sphi 0, %s61
      %s63 = sphi 0, %s61
      %s64 = sphi 0, %s63
      %s78 = sphi 0, %s64
      %s82 = sphi 0, %s82
      %s84 = sphi 0, %s82
      %s85 = sphi 0, %s84
      %s99 = sphi 0, %s85
      %s103 = sphi 0, %s103
      %s105 = sphi 0, %s103
      %s106 = sphi 0, %s105
      %s120 = sphi 0, %s106
      %s124 = sphi 0, %s124
      %s126 = sphi 0, %s124
      %s127 = sphi 0, %s126
      %s141 = sphi 0, %s127
      %s145 = sphi 0, %s145
      %s147 = sphi 0, %s145
      %s148 = sphi 0, %s147
      %s162 = sphi 0, %s148
      %s166 = sphi 0, %s166
      %s168 = sphi 0, %s166
      %s169 = sphi 0, %s168
      %s183 = sphi 0, %s169
      %s187 = sphi 0, %s187
      %s189 = sphi 0, %s187
      %s190 = sphi 0, %s189
      %s204 = sphi 0, %s190
      %s208 = sphi 0, %s208
      %s210 = sphi 0, %s208
      %s211 = sphi 0, %s210
      %s225 = sphi 0, %s211
      %s231 = sphi 0, %s233
      %s234 = sphi 0, %s231
      %s235 = sphi 0, %s234
      %s251 = sphi 0, %s235
      %s257 = sphi 0, %s259
      %s260 = sphi 0, %s257
      %s261 = sphi 0, %s260
      %s277 = sphi 0, %s261
    $region4: #{tpu_custom_call.1} parent=1 // loop_header_branch
      %30 = sbr.rel (%p28) target = $region8
    $region5: #{tpu_custom_call.1} parent=1 // loop_body
      %s32 = ssub.s32 %s27, 1
      %s33 = ssub.s32 %s27, 2
      %s34 = sadd.s32 %s27, 1
      %s35 = ssub.s32 %s27, %s34
      %p36 = scmp.eq.s32.totalorder %s35, 0
      %s38 = sadd.s32 %s37, 1
      %s39 = scalar_select %p36, %s37, %s38
      %p42 = pneg %p36
      %p43 = scmp.eq.s32.totalorder %s27, 1
      %p44 = por %p42, %p43
      %p45 = scmp.ne.s32.totalorder %s37, %s40
      %p46 = scmp.eq.s32.totalorder %s27, 0
      %p47 = por %p45, %p46
      %p48 = scmp.ne.s32.totalorder %s37, %s40
      %p49 = scmp.eq.s32.totalorder %s32, 1
      %p50 = por %p48, %p49
      %p51 = scmp.ne.s32.totalorder %s40, %s41
      %p52 = scmp.eq.s32.totalorder %s32, 0
      %p53 = por %p51, %p52
      %p54 = scmp.ne.s32.totalorder %s40, %s41
      %p55 = scmp.eq.s32.totalorder %s33, 1
      %p56 = por %p54, %p55
      %p58 = scmp.ne.s32.totalorder %s41, %s57
      %p59 = scmp.eq.s32.totalorder %s33, 0
      %p60 = por %p58, %p59
      %s62 = sadd.s32 %s61, 1
      %p65 = scmp.eq.s32.totalorder %s27, 1
      %p66 = scmp.ne.s32.totalorder %s61, %s63
      %p67 = scmp.eq.s32.totalorder %s27, 0
      %p68 = por %p66, %p67
      %p69 = scmp.ne.s32.totalorder %s61, %s63
      %p70 = scmp.eq.s32.totalorder %s32, 1
      %p71 = por %p69, %p70
      %p72 = scmp.ne.s32.totalorder %s63, %s64
      %p73 = scmp.eq.s32.totalorder %s32, 0
      %p74 = por %p72, %p73
      %p75 = scmp.ne.s32.totalorder %s63, %s64
      %p76 = scmp.eq.s32.totalorder %s33, 1
      %p77 = por %p75, %p76
      %p79 = scmp.ne.s32.totalorder %s64, %s78
      %p80 = scmp.eq.s32.totalorder %s33, 0
      %p81 = por %p79, %p80
      %s83 = sadd.s32 %s82, 1
      %p86 = scmp.eq.s32.totalorder %s27, 1
      %p87 = scmp.ne.s32.totalorder %s82, %s84
      %p88 = scmp.eq.s32.totalorder %s27, 0
      %p89 = por %p87, %p88
      %p90 = scmp.ne.s32.totalorder %s82, %s84
      %p91 = scmp.eq.s32.totalorder %s32, 1
      %p92 = por %p90, %p91
      %p93 = scmp.ne.s32.totalorder %s84, %s85
      %p94 = scmp.eq.s32.totalorder %s32, 0
      %p95 = por %p93, %p94
      %p96 = scmp.ne.s32.totalorder %s84, %s85
      %p97 = scmp.eq.s32.totalorder %s33, 1
      %p98 = por %p96, %p97
      %p100 = scmp.ne.s32.totalorder %s85, %s99
      %p101 = scmp.eq.s32.totalorder %s33, 0
      %p102 = por %p100, %p101
      %s104 = sadd.s32 %s103, 1
      %p107 = scmp.eq.s32.totalorder %s27, 1
      %p108 = scmp.ne.s32.totalorder %s103, %s105
      %p109 = scmp.eq.s32.totalorder %s27, 0
      %p110 = por %p108, %p109
      %p111 = scmp.ne.s32.totalorder %s103, %s105
      %p112 = scmp.eq.s32.totalorder %s32, 1
      %p113 = por %p111, %p112
      %p114 = scmp.ne.s32.totalorder %s105, %s106
      %p115 = scmp.eq.s32.totalorder %s32, 0
      %p116 = por %p114, %p115
      %p117 = scmp.ne.s32.totalorder %s105, %s106
      %p118 = scmp.eq.s32.totalorder %s33, 1
      %p119 = por %p117, %p118
      %p121 = scmp.ne.s32.totalorder %s106, %s120
      %p122 = scmp.eq.s32.totalorder %s33, 0
      %p123 = por %p121, %p122
      %s125 = sadd.s32 %s124, 1
      %p128 = scmp.eq.s32.totalorder %s27, 1
      %p129 = scmp.ne.s32.totalorder %s124, %s126
      %p130 = scmp.eq.s32.totalorder %s27, 0
      %p131 = por %p129, %p130
      %p132 = scmp.ne.s32.totalorder %s124, %s126
      %p133 = scmp.eq.s32.totalorder %s32, 1
      %p134 = por %p132, %p133
      %p135 = scmp.ne.s32.totalorder %s126, %s127
      %p136 = scmp.eq.s32.totalorder %s32, 0
      %p137 = por %p135, %p136
      %p138 = scmp.ne.s32.totalorder %s126, %s127
      %p139 = scmp.eq.s32.totalorder %s33, 1
      %p140 = por %p138, %p139
      %p142 = scmp.ne.s32.totalorder %s127, %s141
      %p143 = scmp.eq.s32.totalorder %s33, 0
      %p144 = por %p142, %p143
      %s146 = sadd.s32 %s145, 1
      %p149 = scmp.eq.s32.totalorder %s27, 1
      %p150 = scmp.ne.s32.totalorder %s145, %s147
      %p151 = scmp.eq.s32.totalorder %s27, 0
      %p152 = por %p150, %p151
      %p153 = scmp.ne.s32.totalorder %s145, %s147
      %p154 = scmp.eq.s32.totalorder %s32, 1
      %p155 = por %p153, %p154
      %p156 = scmp.ne.s32.totalorder %s147, %s148
      %p157 = scmp.eq.s32.totalorder %s32, 0
      %p158 = por %p156, %p157
      %p159 = scmp.ne.s32.totalorder %s147, %s148
      %p160 = scmp.eq.s32.totalorder %s33, 1
      %p161 = por %p159, %p160
      %p163 = scmp.ne.s32.totalorder %s148, %s162
      %p164 = scmp.eq.s32.totalorder %s33, 0
      %p165 = por %p163, %p164
      %s167 = sadd.s32 %s166, 1
      %p170 = scmp.eq.s32.totalorder %s27, 1
      %p171 = scmp.ne.s32.totalorder %s166, %s168
      %p172 = scmp.eq.s32.totalorder %s27, 0
      %p173 = por %p171, %p172
      %p174 = scmp.ne.s32.totalorder %s166, %s168
      %p175 = scmp.eq.s32.totalorder %s32, 1
      %p176 = por %p174, %p175
      %p177 = scmp.ne.s32.totalorder %s168, %s169
      %p178 = scmp.eq.s32.totalorder %s32, 0
      %p179 = por %p177, %p178
      %p180 = scmp.ne.s32.totalorder %s168, %s169
      %p181 = scmp.eq.s32.totalorder %s33, 1
      %p182 = por %p180, %p181
      %p184 = scmp.ne.s32.totalorder %s169, %s183
      %p185 = scmp.eq.s32.totalorder %s33, 0
      %p186 = por %p184, %p185
      %s188 = sadd.s32 %s187, 1
      %p191 = scmp.eq.s32.totalorder %s27, 1
      %p192 = scmp.ne.s32.totalorder %s187, %s189
      %p193 = scmp.eq.s32.totalorder %s27, 0
      %p194 = por %p192, %p193
      %p195 = scmp.ne.s32.totalorder %s187, %s189
      %p196 = scmp.eq.s32.totalorder %s32, 1
      %p197 = por %p195, %p196
      %p198 = scmp.ne.s32.totalorder %s189, %s190
      %p199 = scmp.eq.s32.totalorder %s32, 0
      %p200 = por %p198, %p199
      %p201 = scmp.ne.s32.totalorder %s189, %s190
      %p202 = scmp.eq.s32.totalorder %s33, 1
      %p203 = por %p201, %p202
      %p205 = scmp.ne.s32.totalorder %s190, %s204
      %p206 = scmp.eq.s32.totalorder %s33, 0
      %p207 = por %p205, %p206
      %s209 = sadd.s32 %s208, 1
      %p212 = scmp.eq.s32.totalorder %s27, 1
      %p213 = scmp.ne.s32.totalorder %s208, %s210
      %p214 = scmp.eq.s32.totalorder %s27, 0
      %p215 = por %p213, %p214
      %p216 = scmp.ne.s32.totalorder %s208, %s210
      %p217 = scmp.eq.s32.totalorder %s32, 1
      %p218 = por %p216, %p217
      %p219 = scmp.ne.s32.totalorder %s210, %s211
      %p220 = scmp.eq.s32.totalorder %s32, 0
      %p221 = por %p219, %p220
      %p222 = scmp.ne.s32.totalorder %s210, %s211
      %p223 = scmp.eq.s32.totalorder %s33, 1
      %p224 = por %p222, %p223
      %p226 = scmp.ne.s32.totalorder %s211, %s225
      %p227 = scmp.eq.s32.totalorder %s33, 0
      %p228 = por %p226, %p227
      %s229 = ssub.s32 %s27, %s34
      %p230 = scmp.eq.s32.totalorder %s229, 0
      %s232 = sadd.s32 %s231, 1
      %s233 = scalar_select %p230, %s231, %s232
      %p236 = pneg %p230
      %p237 = scmp.eq.s32.totalorder %s27, 1
      %p238 = por %p236, %p237
      %p239 = scmp.ne.s32.totalorder %s231, %s234
      %p240 = scmp.eq.s32.totalorder %s27, 0
      %p241 = por %p239, %p240
      %p242 = scmp.ne.s32.totalorder %s231, %s234
      %p243 = scmp.eq.s32.totalorder %s32, 1
      %p244 = por %p242, %p243
      %p245 = scmp.ne.s32.totalorder %s234, %s235
      %p246 = scmp.eq.s32.totalorder %s32, 0
      %p247 = por %p245, %p246
      %p248 = scmp.ne.s32.totalorder %s234, %s235
      %p249 = scmp.eq.s32.totalorder %s33, 1
      %p250 = por %p248, %p249
      %p252 = scmp.ne.s32.totalorder %s235, %s251
      %p253 = scmp.eq.s32.totalorder %s33, 0
      %p254 = por %p252, %p253
      %s255 = ssub.s32 %s27, %s34
      %p256 = scmp.eq.s32.totalorder %s255, 0
      %s258 = sadd.s32 %s257, 1
      %s259 = scalar_select %p256, %s257, %s258
      %p262 = pneg %p256
      %p263 = scmp.eq.s32.totalorder %s27, 1
      %p264 = por %p262, %p263
      %p265 = scmp.ne.s32.totalorder %s257, %s260
      %p266 = scmp.eq.s32.totalorder %s27, 0
      %p267 = por %p265, %p266
      %p268 = scmp.ne.s32.totalorder %s257, %s260
      %p269 = scmp.eq.s32.totalorder %s32, 1
      %p270 = por %p268, %p269
      %p271 = scmp.ne.s32.totalorder %s260, %s261
      %p272 = scmp.eq.s32.totalorder %s32, 0
      %p273 = por %p271, %p272
      %p274 = scmp.ne.s32.totalorder %s260, %s261
      %p275 = scmp.eq.s32.totalorder %s33, 1
      %p276 = por %p274, %p275
      %p278 = scmp.ne.s32.totalorder %s261, %s277
      %p279 = scmp.eq.s32.totalorder %s33, 0
      %p280 = por %p278, %p279
      %p281 = scmp.le.s32.totalorder 1, %s27
      %p282 = scmp.lt.s32.totalorder %s27, 3
      %p283 = pnand %p281, %p282
      %p284 = pneg %p283
      // Predicated region
      $region9: #{tpu_custom_call.1} parent=5 // pred_check
        _
      $region10: #{tpu_custom_call.1} parent=5 // pred_check_branch
        %286 = sbr.rel (%p283) target = $region12
      $region11: #{tpu_custom_call.1} parent=5 // pred_region
        %s287 = ssub.s32 %s27, 1
        // Predicated region
        $region13: #{tpu_custom_call.1} parent=11 // pred_check
          %p288 = pneg %p74
        $region14: #{tpu_custom_call.1} parent=11 // pred_check_branch
          %290 = sbr.rel (%p288) target = $region16
        $region15: #{tpu_custom_call.1} parent=11 // pred_region
          _
        $region16: #{tpu_custom_call.1} parent=11 // pred_fallthru
          _
        // Predicated region
        $region17: #{tpu_custom_call.1} parent=11 // pred_check
          %p291 = pneg %p95
        $region18: #{tpu_custom_call.1} parent=11 // pred_check_branch
          %293 = sbr.rel (%p291) target = $region20
        $region19: #{tpu_custom_call.1} parent=11 // pred_region
          _
        $region20: #{tpu_custom_call.1} parent=11 // pred_fallthru
          _
        // Predicated region
        $region21: #{tpu_custom_call.1} parent=11 // pred_check
          %p294 = pneg %p116
        $region22: #{tpu_custom_call.1} parent=11 // pred_check_branch
          %296 = sbr.rel (%p294) target = $region24
        $region23: #{tpu_custom_call.1} parent=11 // pred_region
          _
        $region24: #{tpu_custom_call.1} parent=11 // pred_fallthru
          _
        // Predicated region
        $region25: #{tpu_custom_call.1} parent=11 // pred_check
          %p297 = pneg %p137
        $region26: #{tpu_custom_call.1} parent=11 // pred_check_branch
          %299 = sbr.rel (%p297) target = $region28
        $region27: #{tpu_custom_call.1} parent=11 // pred_region
          _
        $region28: #{tpu_custom_call.1} parent=11 // pred_fallthru
          _
        // Predicated region
        $region29: #{tpu_custom_call.1} parent=11 // pred_check
          %p300 = pneg %p158
        $region30: #{tpu_custom_call.1} parent=11 // pred_check_branch
          %302 = sbr.rel (%p300) target = $region32
        $region31: #{tpu_custom_call.1} parent=11 // pred_region
          _
        $region32: #{tpu_custom_call.1} parent=11 // pred_fallthru
          _
        // Predicated region
        $region33: #{tpu_custom_call.1} parent=11 // pred_check
          %p303 = pneg %p179
        $region34: #{tpu_custom_call.1} parent=11 // pred_check_branch
          %305 = sbr.rel (%p303) target = $region36
        $region35: #{tpu_custom_call.1} parent=11 // pred_region
          _
        $region36: #{tpu_custom_call.1} parent=11 // pred_fallthru
          _
        // Predicated region
        $region37: #{tpu_custom_call.1} parent=11 // pred_check
          %p306 = pneg %p200
        $region38: #{tpu_custom_call.1} parent=11 // pred_check_branch
          %308 = sbr.rel (%p306) target = $region40
        $region39: #{tpu_custom_call.1} parent=11 // pred_region
          _
        $region40: #{tpu_custom_call.1} parent=11 // pred_fallthru
          _
        // Predicated region
        $region41: #{tpu_custom_call.1} parent=11 // pred_check
          %p309 = pneg %p221
        $region42: #{tpu_custom_call.1} parent=11 // pred_check_branch
          %311 = sbr.rel (%p309) target = $region44
        $region43: #{tpu_custom_call.1} parent=11 // pred_region
          _
        $region44: #{tpu_custom_call.1} parent=11 // pred_fallthru
          _
      $region12: #{tpu_custom_call.1} parent=5 // pred_fallthru
        _
      %p312 = scmp.lt.s32.totalorder %s27, 2
      // Predicated region
      $region45: #{tpu_custom_call.1} parent=5 // pred_check
        %p313 = pneg %p312
      $region46: #{tpu_custom_call.1} parent=5 // pred_check_branch
        %315 = sbr.rel (%p313) target = $region48
      $region47: #{tpu_custom_call.1} parent=5 // pred_region
        // Predicated region
        $region49: #{tpu_custom_call.1} parent=47 // pred_check
          %p316 = pneg %p47
        $region50: #{tpu_custom_call.1} parent=47 // pred_check_branch
          %318 = sbr.rel (%p316) target = $region52
        $region51: #{tpu_custom_call.1} parent=47 // pred_region
          %p319 = scmp.lt.s32.totalorder %s27, 1
          %s320 = scalar_select %p319, %s27, 1
          %s321 = smul.addr %s320, 4
          %s322 = scalar_lea.vmem %s0, %s321
        $region52: #{tpu_custom_call.1} parent=47 // pred_fallthru
          _
      $region48: #{tpu_custom_call.1} parent=5 // pred_fallthru
        _
      %p323 = scmp.le.s32.totalorder 1, %s27
      %p324 = scmp.lt.s32.totalorder %s27, 3
      %p325 = pnand %p323, %p324
      %p326 = pneg %p325
      // Predicated region
      $region53: #{tpu_custom_call.1} parent=5 // pred_check
        _
      $region54: #{tpu_custom_call.1} parent=5 // pred_check_branch
        %328 = sbr.rel (%p325) target = $region56
      $region55: #{tpu_custom_call.1} parent=5 // pred_region
        %s329 = ssub.s32 %s27, 1
        %p330 = scmp.lt.s32.totalorder %s32, 1
        %s331 = scalar_select %p330, %s32, 1
        %s332 = smul.addr %s331, 4
        %s333 = scalar_lea.vmem %s0, %s332
        %p334 = pneg %p53
        %p335 = pneg %p50
        %p336 = pneg %p74
        %p337 = pneg %p71
        %p338 = pneg %p95
        %p339 = pneg %p92
        %p340 = pneg %p116
        %p341 = pneg %p113
        %p342 = pneg %p137
        %p343 = pneg %p134
        %p344 = pneg %p158
        %p345 = pneg %p155
        %p346 = pneg %p179
        %p347 = pneg %p176
        %p348 = pneg %p200
        %p349 = pneg %p197
        %p350 = pneg %p221
        %p351 = pneg %p218
        %p352 = pneg %p247
        %p353 = pneg %p244
        %s354 = sand.u32 %s234, 1
        %s355 = scalar_lea.sflag [#allocation5], %s354
        %s356 = sand.u32 %s234, 1
        %s357 = smul.addr %s356, 4
        %s358 = scalar_lea.vmem [#allocation4], %s357
        %p359 = pneg %p273
        %p360 = pneg %p270
        %s361 = sand.u32 %s260, 1
        %s362 = scalar_lea.sflag [#allocation7], %s361
        %s363 = sand.u32 %s260, 1
        %s364 = smul.addr %s363, 4
        %s365 = scalar_lea.vmem [#allocation6], %s364
        %p366 = scmp.lt.s32.totalorder %s32, 1
        %s367 = scalar_select %p366, %s32, 1
        %s368 = smul.addr %s367, 4
        %s369 = scalar_lea.vmem %s0, %s368
        %v370 = vlaneseq
        %v371 = vand.u32 %v370, 127
        %v372 = vadd.s32 %v371, 1
        %v373 = vcvt.s32.f32 %v372
        %v374 = vmul.f32 %v373, 8.0
        %v375 = vrcp.pop %v374
        %v376 = vmul.f32 %v374, %v375
        %v377 = vsub.f32 1.0, %v376
        %v378 = vmul.f32 %v375, %v377
        %v379 = vadd.f32 %v375, %v378
        %vm380 = vweird.f32 %v374
        %vm381 = vweird.f32 %v375
        %vm382 = vmor %vm380, %vm381
        %v383 = vsel %vm382, %v375, %v379
        %v384 = vand.u32 2147483647, %v374
        %vm385 = vcmp.eq.f32.partialorder %v384, 8.507059e+37
        %v386 = vand.u32 %v374, 2147483648
        %v387 = vor.u32 1.1754944e-38, %v386
        %v388 = vsel %vm385, %v387, %v383
        %v389 = vmul.f32 1.0, %v388
        %vm390 = vcmp.lt.s32.totalorder %v371, 16
        %vm391 = vcmp.ge.s32.totalorder %v371, 1
        %vm392 = vcmp.ge.s32.totalorder %v371, 2
        %vm393 = vcmp.ge.s32.totalorder %v371, 4
        %vm394 = vcmp.ge.s32.totalorder %v371, 8
        %vm395 = vcmp.ge.s32.totalorder %v371, 16
        %vm396 = vcmp.ge.s32.totalorder %v371, 32
        %vm397 = vcmp.ge.s32.totalorder %v371, 64
        %v398 = vld [vmem:[%s1] sm:$0xff]
        %v399 = vld [vmem:[%s7] sm:$0xff]
        %v400 = vld [vmem:[%s2] sm:$0xff]
        %v401 = vld [vmem:[%s8] sm:$0xff]
        %v402 = vld [vmem:[%s6] sm:$0xff]
        %v403 = vld [vmem:[#allocation2] sm:$0x1]
        %v404 = vld [vmem:[#allocation3] sm:$0x1]
        %v405 = vld [vmem:[%s5] sm:$0xff]
        %v406 = vld [vmem:[%s369] sm:$0xf]
        %408 = vset.pattern.permute.xlu0 0
        %409 = vperm.xlu0 %408, %v400
        %v410 = vpop.permute.xlu0 %409
        %vm412 = vcmask 31744
        %v414 = vsel %vm412, %v398, 0
        %vm416 = vcmask 1043456
        %v418 = vsel %vm416, %v406, 0
        %420 = vmatpush.msra.mxu0 0.0
        %421 = vmatpush.msra.mxu0 0.0
        %422 = vmatpush.msra.mxu0 0.0
        %423 = vmatpush.msra.mxu0 0.0
        %424 = vmatpush.msra.mxu0 0.0
        %425 = vmatpush.msra.mxu0 0.0
        %426 = vmatpush.msra.mxu0 0.0
        %427 = vmatpush.msra.mxu0 0.0
        %428 = vmatpush.msra.mxu0 0.0
        %429 = vmatpush.msra.mxu0 0.0
        %430 = vmatpush.msra.mxu0 0.0
        %431 = vmatpush.msra.mxu0 0.0
        %432 = vmatpush.msra.mxu0 0.0
        %433 = vmatpush.msra.mxu0 0.0
        %434 = vmatpush.msra.mxu0 0.0
        %v435 = vand.u32 %v418, 4294901760
        %436 = vmatpush.msra.mxu0 %v435
        %v437 = vand.u32 %v414, 4294901760
        %v438 = vsub.f32 %v414, %v437
        %v439 = vand.u32 %v438, 4294901760
        %v440 = vsub.f32 %v438, %v439
        %v441 = vand.u32 %v440, 4294901760
        %442 = vmatmul.f32.gmra.mxu0 %v441
        %v443 = vpop.f32.mrf.mxu0
        %v444 = vadd.f32 %v410, %v443
        %445 = vdwg.mxu0
        %446 = vmatpush.msra.mxu0 0.0
        %447 = vmatpush.msra.mxu0 0.0
        %448 = vmatpush.msra.mxu0 0.0
        %449 = vmatpush.msra.mxu0 0.0
        %450 = vmatpush.msra.mxu0 0.0
        %451 = vmatpush.msra.mxu0 0.0
        %452 = vmatpush.msra.mxu0 0.0
        %453 = vmatpush.msra.mxu0 0.0
        %454 = vmatpush.msra.mxu0 0.0
        %455 = vmatpush.msra.mxu0 0.0
        %456 = vmatpush.msra.mxu0 0.0
        %457 = vmatpush.msra.mxu0 0.0
        %458 = vmatpush.msra.mxu0 0.0
        %459 = vmatpush.msra.mxu0 0.0
        %460 = vmatpush.msra.mxu0 0.0
        %v461 = vand.u32 %v418, 4294901760
        %v462 = vsub.f32 %v418, %v461
        %v463 = vand.u32 %v462, 4294901760
        %v464 = vsub.f32 %v462, %v463
        %v465 = vand.u32 %v464, 4294901760
        %466 = vmatpush.msra.mxu0 %v465
        %v467 = vand.u32 %v414, 4294901760
        %468 = vmatmul.f32.gmra.mxu0 %v467
        %v469 = vpop.f32.mrf.mxu0
        %v470 = vadd.f32 %v444, %v469
        %471 = vdwg.mxu0
        %472 = vmatpush.msra.mxu0 0.0
        %473 = vmatpush.msra.mxu0 0.0
        %474 = vmatpush.msra.mxu0 0.0
        %475 = vmatpush.msra.mxu0 0.0
        %476 = vmatpush.msra.mxu0 0.0
        %477 = vmatpush.msra.mxu0 0.0
        %478 = vmatpush.msra.mxu0 0.0
        %479 = vmatpush.msra.mxu0 0.0
        %480 = vmatpush.msra.mxu0 0.0
        %481 = vmatpush.msra.mxu0 0.0
        %482 = vmatpush.msra.mxu0 0.0
        %483 = vmatpush.msra.mxu0 0.0
        %484 = vmatpush.msra.mxu0 0.0
        %485 = vmatpush.msra.mxu0 0.0
        %486 = vmatpush.msra.mxu0 0.0
        %v487 = vand.u32 %v418, 4294901760
        %v488 = vsub.f32 %v418, %v487
        %489 = vmatpush.msra.mxu0 %v488
        %v490 = vand.u32 %v414, 4294901760
        %v491 = vsub.f32 %v414, %v490
        %492 = vmatmul.f32.gmra.mxu0 %v491
        %v493 = vpop.f32.mrf.mxu0
        %v494 = vadd.f32 %v470, %v493
        %495 = vdwg.mxu0
        %496 = vmatpush.msra.mxu0 0.0
        %497 = vmatpush.msra.mxu0 0.0
        %498 = vmatpush.msra.mxu0 0.0
        %499 = vmatpush.msra.mxu0 0.0
        %500 = vmatpush.msra.mxu0 0.0
        %501 = vmatpush.msra.mxu0 0.0
        %502 = vmatpush.msra.mxu0 0.0
        %503 = vmatpush.msra.mxu0 0.0
        %504 = vmatpush.msra.mxu0 0.0
        %505 = vmatpush.msra.mxu0 0.0
        %506 = vmatpush.msra.mxu0 0.0
        %507 = vmatpush.msra.mxu0 0.0
        %508 = vmatpush.msra.mxu0 0.0
        %509 = vmatpush.msra.mxu0 0.0
        %510 = vmatpush.msra.mxu0 0.0
        %v511 = vand.u32 %v418, 4294901760
        %512 = vmatpush.msra.mxu0 %v511
        %v513 = vand.u32 %v414, 4294901760
        %v514 = vsub.f32 %v414, %v513
        %v515 = vand.u32 %v514, 4294901760
        %516 = vmatmul.f32.gmra.mxu0 %v515
        %v517 = vpop.f32.mrf.mxu0
        %v518 = vadd.f32 %v494, %v517
        %519 = vdwg.mxu0
        %520 = vmatpush.msra.mxu0 0.0
        %521 = vmatpush.msra.mxu0 0.0
        %522 = vmatpush.msra.mxu0 0.0
        %523 = vmatpush.msra.mxu0 0.0
        %524 = vmatpush.msra.mxu0 0.0
        %525 = vmatpush.msra.mxu0 0.0
        %526 = vmatpush.msra.mxu0 0.0
        %527 = vmatpush.msra.mxu0 0.0
        %528 = vmatpush.msra.mxu0 0.0
        %529 = vmatpush.msra.mxu0 0.0
        %530 = vmatpush.msra.mxu0 0.0
        %531 = vmatpush.msra.mxu0 0.0
        %532 = vmatpush.msra.mxu0 0.0
        %533 = vmatpush.msra.mxu0 0.0
        %534 = vmatpush.msra.mxu0 0.0
        %v535 = vand.u32 %v418, 4294901760
        %v536 = vsub.f32 %v418, %v535
        %v537 = vand.u32 %v536, 4294901760
        %538 = vmatpush.msra.mxu0 %v537
        %v539 = vand.u32 %v414, 4294901760
        %540 = vmatmul.f32.gmra.mxu0 %v539
        %v541 = vpop.f32.mrf.mxu0
        %v542 = vadd.f32 %v518, %v541
        %543 = vdwg.mxu0
        %544 = vmatpush.msra.mxu0 0.0
        %545 = vmatpush.msra.mxu0 0.0
        %546 = vmatpush.msra.mxu0 0.0
        %547 = vmatpush.msra.mxu0 0.0
        %548 = vmatpush.msra.mxu0 0.0
        %549 = vmatpush.msra.mxu0 0.0
        %550 = vmatpush.msra.mxu0 0.0
        %551 = vmatpush.msra.mxu0 0.0
        %552 = vmatpush.msra.mxu0 0.0
        %553 = vmatpush.msra.mxu0 0.0
        %554 = vmatpush.msra.mxu0 0.0
        %555 = vmatpush.msra.mxu0 0.0
        %556 = vmatpush.msra.mxu0 0.0
        %557 = vmatpush.msra.mxu0 0.0
        %558 = vmatpush.msra.mxu0 0.0
        %v559 = vand.u32 %v418, 4294901760
        %560 = vmatpush.msra.mxu0 %v559
        %v561 = vand.u32 %v414, 4294901760
        %562 = vmatmul.f32.gmra.mxu0 %v561
        %v563 = vpop.f32.mrf.mxu0
        %v564 = vadd.f32 %v542, %v563
        %565 = vdwg.mxu0
        %vm566 = vcmp.gt.f32.partialorder %v564, 0.0
        %v568 = vperm.slane %v403, 0
        %569 = vset.pattern.permute.xlu0 0
        %570 = vperm.xlu0 %569, %v568
        %v571 = vpop.permute.xlu0 %570
        %v573 = vmul.f32 %v571, %v564
        %v574 = vsel %vm566, %v564, %v573
        %v575 = vrot.slane %v574, 4
        %v576 = vadd.f32 %v574, %v575
        %v577 = vrot.slane %v576, 2
        %v578 = vadd.f32 %v576, %v577
        %v579 = vrot.slane %v578, 1
        %v580 = vadd.f32 %v578, %v579
        %v581 = vmul.f32 %v574, %v574
        %v582 = vrot.slane %v581, 4
        %v583 = vadd.f32 %v581, %v582
        %v584 = vrot.slane %v583, 2
        %v585 = vadd.f32 %v583, %v584
        %v586 = vrot.slane %v585, 1
        %v587 = vadd.f32 %v585, %v586
        %vm588 = vcmask 1040384
        %v589 = vsel %vm588, %v580, %v587
        %590 = vrot.lane.b32.xlu0 %v589, 1
        %v591 = vpop.permute.xlu0 %590
        %v592 = vsel %vm391, 1, 0
        %vm593 = vcmp.eq.s32.totalorder %v592, 1
        %v594 = vsel %vm593, %v591, 0.0
        %v595 = vadd.f32 %v589, %v594
        %596 = vrot.lane.b32.xlu0 %v595, 2
        %v597 = vpop.permute.xlu0 %596
        %v598 = vsel %vm392, 1, 0
        %vm599 = vcmp.eq.s32.totalorder %v598, 1
        %v600 = vsel %vm599, %v597, 0.0
        %v601 = vadd.f32 %v595, %v600
        %602 = vrot.lane.b32.xlu0 %v601, 4
        %v603 = vpop.permute.xlu0 %602
        %v604 = vsel %vm393, 1, 0
        %vm605 = vcmp.eq.s32.totalorder %v604, 1
        %v606 = vsel %vm605, %v603, 0.0
        %v607 = vadd.f32 %v601, %v606
        %608 = vrot.lane.b32.xlu0 %v607, 8
        %v609 = vpop.permute.xlu0 %608
        %v610 = vsel %vm394, 1, 0
        %vm611 = vcmp.eq.s32.totalorder %v610, 1
        %v612 = vsel %vm611, %v609, 0.0
        %v613 = vadd.f32 %v607, %v612
        %614 = vrot.lane.b32.xlu0 %v613, 16
        %v615 = vpop.permute.xlu0 %614
        %v616 = vsel %vm395, 1, 0
        %vm617 = vcmp.eq.s32.totalorder %v616, 1
        %v618 = vsel %vm617, %v615, 0.0
        %v619 = vadd.f32 %v613, %v618
        %620 = vrot.lane.b32.xlu0 %v619, 32
        %v621 = vpop.permute.xlu0 %620
        %v622 = vsel %vm396, 1, 0
        %vm623 = vcmp.eq.s32.totalorder %v622, 1
        %v624 = vsel %vm623, %v621, 0.0
        %v625 = vadd.f32 %v619, %v624
        %626 = vrot.lane.b32.xlu0 %v625, 64
        %v627 = vpop.permute.xlu0 %626
        %v628 = vsel %vm397, 1, 0
        %vm629 = vcmp.eq.s32.totalorder %v628, 1
        %v630 = vsel %vm629, %v627, 0.0
        %v631 = vadd.f32 %v625, %v630
        %v632 = vmul.f32 %v631, %v389
        %v633 = vmul.f32 %v632, %v632
        %v635 = vrot.slane %v633, 7
        %v637 = vsub.f32 %v632, %v635
        %v638 = vperm.slane %v632, 0
        %v639 = vsub.f32 %v574, %v638
        %v640 = vrsqrt.pop %v637
        %v641 = vmul.f32 %v640, %v637
        %v642 = vmul.f32 %v641, %v640
        %v643 = vmul.f32 0.5, %v642
        %v644 = vsub.f32 1.5, %v643
        %v645 = vmul.f32 %v640, %v644
        %vm646 = vweird.f32 %v637
        %vm647 = vweird.f32 %v640
        %vm648 = vmor %vm646, %vm647
        %v649 = vsel %vm648, %v640, %v645
        %v650 = vperm.slane %v649, 1
        %v651 = vmul.f32 %v639, %v650
        %v652 = vsel %vm390, 1, 0
        %vm653 = vcmp.eq.s32.totalorder %v652, 1
        %v654 = vsel %vm653, %v651, 0.0
        %655 = vrot.lane.b32.xlu0 %v654, 2
        %v656 = vpop.permute.xlu0 %655
        %658 = vset.pattern.permute.xlu0 0
        %659 = vperm.xlu0 %658, %v405
        %v660 = vpop.permute.xlu0 %659
        %v662 = vmul.f32 %v660, %v656
        %663 = vset.pattern.permute.xlu0 1
        %664 = vperm.xlu0 %663, %v405
        %v665 = vpop.permute.xlu0 %664
        %v667 = vmul.f32 %v665, %v654
        %v668 = vadd.f32 %v662, %v667
        %669 = vrot.lane.b32.xlu0 %v654, 126
        %v670 = vpop.permute.xlu0 %669
        %671 = vset.pattern.permute.xlu0 2
        %672 = vperm.xlu0 %671, %v405
        %v673 = vpop.permute.xlu0 %672
        %v675 = vmul.f32 %v673, %v670
        %v676 = vadd.f32 %v668, %v675
        %678 = vset.pattern.permute.xlu0 0
        %679 = vperm.xlu0 %678, %v402
        %v680 = vpop.permute.xlu0 %679
        %v682 = vadd.f32 %v676, %v680
        %vm683 = vcmp.gt.f32.partialorder %v682, 0.0
        %v685 = vperm.slane %v404, 0
        %686 = vset.pattern.permute.xlu0 0
        %687 = vperm.xlu0 %686, %v685
        %v688 = vpop.permute.xlu0 %687
        %v690 = vmul.f32 %v688, %v682
        %v691 = vsel %vm683, %v682, %v690
        %v692 = vrot.slane %v691, 4
        %v693 = vadd.f32 %v691, %v692
        %v694 = vrot.slane %v693, 2
        %v695 = vadd.f32 %v693, %v694
        %v696 = vrot.slane %v695, 1
        %v697 = vadd.f32 %v695, %v696
        %v698 = vmul.f32 %v691, %v691
        %v699 = vrot.slane %v698, 4
        %v700 = vadd.f32 %v698, %v699
        %v701 = vrot.slane %v700, 2
        %v702 = vadd.f32 %v700, %v701
        %v703 = vrot.slane %v702, 1
        %v704 = vadd.f32 %v702, %v703
        %v705 = vsel %vm588, %v697, %v704
        %706 = vrot.lane.b32.xlu0 %v705, 1
        %v707 = vpop.permute.xlu0 %706
        %v708 = vsel %vm593, %v707, 0.0
        %v709 = vadd.f32 %v705, %v708
        %710 = vrot.lane.b32.xlu0 %v709, 2
        %v711 = vpop.permute.xlu0 %710
        %v712 = vsel %vm599, %v711, 0.0
        %v713 = vadd.f32 %v709, %v712
        %714 = vrot.lane.b32.xlu0 %v713, 4
        %v715 = vpop.permute.xlu0 %714
        %v716 = vsel %vm605, %v715, 0.0
        %v717 = vadd.f32 %v713, %v716
        %718 = vrot.lane.b32.xlu0 %v717, 8
        %v719 = vpop.permute.xlu0 %718
        %v720 = vsel %vm611, %v719, 0.0
        %v721 = vadd.f32 %v717, %v720
        %722 = vrot.lane.b32.xlu0 %v721, 16
        %v723 = vpop.permute.xlu0 %722
        %v724 = vsel %vm617, %v723, 0.0
        %v725 = vadd.f32 %v721, %v724
        %726 = vrot.lane.b32.xlu0 %v725, 32
        %v727 = vpop.permute.xlu0 %726
        %v728 = vsel %vm623, %v727, 0.0
        %v729 = vadd.f32 %v725, %v728
        %730 = vrot.lane.b32.xlu0 %v729, 64
        %v731 = vpop.permute.xlu0 %730
        %v732 = vsel %vm629, %v731, 0.0
        %v733 = vadd.f32 %v729, %v732
        %v734 = vmul.f32 %v733, %v389
        %v735 = vmul.f32 %v734, %v734
        %v737 = vrot.slane %v735, 7
        %v739 = vsub.f32 %v734, %v737
        %v740 = vperm.slane %v734, 0
        %v741 = vsub.f32 %v691, %v740
        %v742 = vrsqrt.pop %v739
        %v743 = vmul.f32 %v742, %v739
        %v744 = vmul.f32 %v743, %v742
        %v745 = vmul.f32 0.5, %v744
        %v746 = vsub.f32 1.5, %v745
        %v747 = vmul.f32 %v742, %v746
        %vm748 = vweird.f32 %v739
        %vm749 = vweird.f32 %v742
        %vm750 = vmor %vm748, %vm749
        %v751 = vsel %vm750, %v742, %v747
        %v752 = vperm.slane %v751, 1
        %v753 = vmul.f32 %v741, %v752
        %755 = vset.pattern.permute.xlu0 0
        %756 = vperm.xlu0 %755, %v401
        %v757 = vpop.permute.xlu0 %756
        %vm759 = vcmask 64512
        %v761 = vsel %vm759, %v399, 0
        %763 = vmatpush.msra.mxu0 0.0
        %764 = vmatpush.msra.mxu0 0.0
        %765 = vmatpush.msra.mxu0 0.0
        %766 = vmatpush.msra.mxu0 0.0
        %767 = vmatpush.msra.mxu0 0.0
        %768 = vmatpush.msra.mxu0 0.0
        %769 = vmatpush.msra.mxu0 0.0
        %770 = vmatpush.msra.mxu0 0.0
        %771 = vmatpush.msra.mxu0 0.0
        %772 = vmatpush.msra.mxu0 0.0
        %773 = vmatpush.msra.mxu0 0.0
        %774 = vmatpush.msra.mxu0 0.0
        %775 = vmatpush.msra.mxu0 0.0
        %776 = vmatpush.msra.mxu0 0.0
        %777 = vmatpush.msra.mxu0 0.0
        %v778 = vand.u32 %v753, 4294901760
        %779 = vmatpush.msra.mxu0 %v778
        %v780 = vand.u32 %v761, 4294901760
        %v781 = vsub.f32 %v761, %v780
        %v782 = vand.u32 %v781, 4294901760
        %v783 = vsub.f32 %v781, %v782
        %v784 = vand.u32 %v783, 4294901760
        %785 = vmatmul.f32.gmra.mxu0 %v784
        %v786 = vpop.f32.mrf.mxu0
        %v787 = vadd.f32 %v757, %v786
        %788 = vdwg.mxu0
        %789 = vmatpush.msra.mxu0 0.0
        %790 = vmatpush.msra.mxu0 0.0
        %791 = vmatpush.msra.mxu0 0.0
        %792 = vmatpush.msra.mxu0 0.0
        %793 = vmatpush.msra.mxu0 0.0
        %794 = vmatpush.msra.mxu0 0.0
        %795 = vmatpush.msra.mxu0 0.0
        %796 = vmatpush.msra.mxu0 0.0
        %797 = vmatpush.msra.mxu0 0.0
        %798 = vmatpush.msra.mxu0 0.0
        %799 = vmatpush.msra.mxu0 0.0
        %800 = vmatpush.msra.mxu0 0.0
        %801 = vmatpush.msra.mxu0 0.0
        %802 = vmatpush.msra.mxu0 0.0
        %803 = vmatpush.msra.mxu0 0.0
        %v804 = vand.u32 %v753, 4294901760
        %v805 = vsub.f32 %v753, %v804
        %v806 = vand.u32 %v805, 4294901760
        %v807 = vsub.f32 %v805, %v806
        %v808 = vand.u32 %v807, 4294901760
        %809 = vmatpush.msra.mxu0 %v808
        %v810 = vand.u32 %v761, 4294901760
        %811 = vmatmul.f32.gmra.mxu0 %v810
        %v812 = vpop.f32.mrf.mxu0
        %v813 = vadd.f32 %v787, %v812
        %814 = vdwg.mxu0
        %815 = vmatpush.msra.mxu0 0.0
        %816 = vmatpush.msra.mxu0 0.0
        %817 = vmatpush.msra.mxu0 0.0
        %818 = vmatpush.msra.mxu0 0.0
        %819 = vmatpush.msra.mxu0 0.0
        %820 = vmatpush.msra.mxu0 0.0
        %821 = vmatpush.msra.mxu0 0.0
        %822 = vmatpush.msra.mxu0 0.0
        %823 = vmatpush.msra.mxu0 0.0
        %824 = vmatpush.msra.mxu0 0.0
        %825 = vmatpush.msra.mxu0 0.0
        %826 = vmatpush.msra.mxu0 0.0
        %827 = vmatpush.msra.mxu0 0.0
        %828 = vmatpush.msra.mxu0 0.0
        %829 = vmatpush.msra.mxu0 0.0
        %v830 = vand.u32 %v753, 4294901760
        %v831 = vsub.f32 %v753, %v830
        %832 = vmatpush.msra.mxu0 %v831
        %v833 = vand.u32 %v761, 4294901760
        %v834 = vsub.f32 %v761, %v833
        %835 = vmatmul.f32.gmra.mxu0 %v834
        %v836 = vpop.f32.mrf.mxu0
        %v837 = vadd.f32 %v813, %v836
        %838 = vdwg.mxu0
        %839 = vmatpush.msra.mxu0 0.0
        %840 = vmatpush.msra.mxu0 0.0
        %841 = vmatpush.msra.mxu0 0.0
        %842 = vmatpush.msra.mxu0 0.0
        %843 = vmatpush.msra.mxu0 0.0
        %844 = vmatpush.msra.mxu0 0.0
        %845 = vmatpush.msra.mxu0 0.0
        %846 = vmatpush.msra.mxu0 0.0
        %847 = vmatpush.msra.mxu0 0.0
        %848 = vmatpush.msra.mxu0 0.0
        %849 = vmatpush.msra.mxu0 0.0
        %850 = vmatpush.msra.mxu0 0.0
        %851 = vmatpush.msra.mxu0 0.0
        %852 = vmatpush.msra.mxu0 0.0
        %853 = vmatpush.msra.mxu0 0.0
        %v854 = vand.u32 %v753, 4294901760
        %855 = vmatpush.msra.mxu0 %v854
        %v856 = vand.u32 %v761, 4294901760
        %v857 = vsub.f32 %v761, %v856
        %v858 = vand.u32 %v857, 4294901760
        %859 = vmatmul.f32.gmra.mxu0 %v858
        %v860 = vpop.f32.mrf.mxu0
        %v861 = vadd.f32 %v837, %v860
        %862 = vdwg.mxu0
        %863 = vmatpush.msra.mxu0 0.0
        %864 = vmatpush.msra.mxu0 0.0
        %865 = vmatpush.msra.mxu0 0.0
        %866 = vmatpush.msra.mxu0 0.0
        %867 = vmatpush.msra.mxu0 0.0
        %868 = vmatpush.msra.mxu0 0.0
        %869 = vmatpush.msra.mxu0 0.0
        %870 = vmatpush.msra.mxu0 0.0
        %871 = vmatpush.msra.mxu0 0.0
        %872 = vmatpush.msra.mxu0 0.0
        %873 = vmatpush.msra.mxu0 0.0
        %874 = vmatpush.msra.mxu0 0.0
        %875 = vmatpush.msra.mxu0 0.0
        %876 = vmatpush.msra.mxu0 0.0
        %877 = vmatpush.msra.mxu0 0.0
        %v878 = vand.u32 %v753, 4294901760
        %v879 = vsub.f32 %v753, %v878
        %v880 = vand.u32 %v879, 4294901760
        %881 = vmatpush.msra.mxu0 %v880
        %v882 = vand.u32 %v761, 4294901760
        %883 = vmatmul.f32.gmra.mxu0 %v882
        %v884 = vpop.f32.mrf.mxu0
        %v885 = vadd.f32 %v861, %v884
        %886 = vdwg.mxu0
        %887 = vmatpush.msra.mxu0 0.0
        %888 = vmatpush.msra.mxu0 0.0
        %889 = vmatpush.msra.mxu0 0.0
        %890 = vmatpush.msra.mxu0 0.0
        %891 = vmatpush.msra.mxu0 0.0
        %892 = vmatpush.msra.mxu0 0.0
        %893 = vmatpush.msra.mxu0 0.0
        %894 = vmatpush.msra.mxu0 0.0
        %895 = vmatpush.msra.mxu0 0.0
        %896 = vmatpush.msra.mxu0 0.0
        %897 = vmatpush.msra.mxu0 0.0
        %898 = vmatpush.msra.mxu0 0.0
        %899 = vmatpush.msra.mxu0 0.0
        %900 = vmatpush.msra.mxu0 0.0
        %901 = vmatpush.msra.mxu0 0.0
        %v902 = vand.u32 %v753, 4294901760
        %903 = vmatpush.msra.mxu0 %v902
        %v904 = vand.u32 %v761, 4294901760
        %905 = vmatmul.f32.gmra.mxu0 %v904
        %v906 = vpop.f32.mrf.mxu0
        %v907 = vadd.f32 %v885, %v906
        %908 = vdwg.mxu0
        %v909 = vadd.f32 %v907, %v406
        %910 = vst [vmem:[%s358] sm:$0xf] %v909
        %911 = vst [vmem:[%s365 - $0x4] sm:$0xf0] %v907
        %s912 = sand.u32 %s234, 1
        %s913 = scalar_lea.sflag [#allocation5], %s912
        %s914 = sand.u32 %s234, 1
        %s915 = smul.addr %s914, 4
        %s916 = scalar_lea.vmem [#allocation4], %s915
        %s917 = sand.u32 %s260, 1
        %s918 = scalar_lea.sflag [#allocation7], %s917
        %s919 = sand.u32 %s260, 1
        %s920 = smul.addr %s919, 4
        %s921 = scalar_lea.vmem [#allocation6], %s920
        // Predicated region
        $region57: #{tpu_custom_call.1} parent=55 // pred_check
          %p922 = pneg %p244
        $region58: #{tpu_custom_call.1} parent=55 // pred_check_branch
          %924 = sbr.rel (%p922) target = $region60
        $region59: #{tpu_custom_call.1} parent=55 // pred_region
          %926 = vsyncadd %s913, 0
          %s927 = smul.addr %s32, 4
          %s928 = scalar_lea.hbm %s9, %s927
          %s930 = sshll.u32 %s916, 4
          %s931 = int_to_ptr.vmem [resolvable:$true] %s930
          %s932 = sshll.u32 %s928, 4
          %s933 = int_to_ptr.hbm [resolvable:$true] %s932
          %935 = dma.vmem_to_hbm [thread:$0]  %s931, 64, %s933, %s913
        $region60: #{tpu_custom_call.1} parent=55 // pred_fallthru
          _
        // Predicated region
        $region61: #{tpu_custom_call.1} parent=55 // pred_check
          %p936 = pneg %p270
        $region62: #{tpu_custom_call.1} parent=55 // pred_check_branch
          %938 = sbr.rel (%p936) target = $region64
        $region63: #{tpu_custom_call.1} parent=55 // pred_region
          %940 = vsyncadd %s918, 0
          %s941 = smul.addr %s32, 4
          %s942 = scalar_lea.hbm %s10, %s941
          %s944 = sshll.u32 %s921, 4
          %s945 = int_to_ptr.vmem [resolvable:$true] %s944
          %s946 = sshll.u32 %s942, 4
          %s947 = int_to_ptr.hbm [resolvable:$true] %s946
          %949 = dma.vmem_to_hbm [thread:$0]  %s945, 64, %s947, %s918
        $region64: #{tpu_custom_call.1} parent=55 // pred_fallthru
          _
      $region56: #{tpu_custom_call.1} parent=5 // pred_fallthru
        _
      %p950 = scmp.le.s32.totalorder 2, %s27
      // Predicated region
      $region65: #{tpu_custom_call.1} parent=5 // pred_check
        %p951 = pneg %p950
      $region66: #{tpu_custom_call.1} parent=5 // pred_check_branch
        %953 = sbr.rel (%p951) target = $region68
      $region67: #{tpu_custom_call.1} parent=5 // pred_region
        %s954 = ssub.s32 %s27, 2
        // Predicated region
        $region69: #{tpu_custom_call.1} parent=67 // pred_check
          %p955 = pneg %p250
        $region70: #{tpu_custom_call.1} parent=67 // pred_check_branch
          %957 = sbr.rel (%p955) target = $region72
        $region71: #{tpu_custom_call.1} parent=67 // pred_region
          %s958 = sand.u32 %s235, 1
          %s959 = scalar_lea.sflag [#allocation5], %s958
          %s960 = sand.u32 %s235, 1
          %s961 = smul.addr %s960, 4
          %s962 = scalar_lea.vmem [#allocation4], %s961
          %964 = dma.done %s959, 64
        $region72: #{tpu_custom_call.1} parent=67 // pred_fallthru
          _
        // Predicated region
        $region73: #{tpu_custom_call.1} parent=67 // pred_check
          %p965 = pneg %p276
        $region74: #{tpu_custom_call.1} parent=67 // pred_check_branch
          %967 = sbr.rel (%p965) target = $region76
        $region75: #{tpu_custom_call.1} parent=67 // pred_region
          %s968 = sand.u32 %s261, 1
          %s969 = scalar_lea.sflag [#allocation7], %s968
          %s970 = sand.u32 %s261, 1
          %s971 = smul.addr %s970, 4
          %s972 = scalar_lea.vmem [#allocation6], %s971
          %974 = dma.done %s969, 64
        $region76: #{tpu_custom_call.1} parent=67 // pred_fallthru
          _
      $region68: #{tpu_custom_call.1} parent=5 // pred_fallthru
        _
    $region6: #{tpu_custom_call.1} parent=1 // loop_footer
      %s31 = sadd.s32 1, %s27
    $region7: #{tpu_custom_call.1} parent=1 // loop_footer_branch
      %26 = sbr.rel target = $region3
    $region8: #{tpu_custom_call.1} parent=1 // loop_exit
      _
    %975 = vsyncpa [#allocation5], 1
    %s976 = scalar_lea.sflag [#allocation5], 1
    %977 = vsyncpa %s976, 1
    %978 = vsyncpa [#allocation7], 1
    %s979 = scalar_lea.sflag [#allocation7], 1
    %980 = vsyncpa %s979, 1

</llo_original>
